<compile_context>
chip_gen: v7x
topology: tpu7x:2x2x1
jax: 0.10.0
libtpu: 0.0.40
codegen_flags: <defaults>
</compile_context>

<pallas_src>
import functools

import jax
import jax.numpy as jnp
from jax.experimental import pallas as pl
from jax.experimental.pallas import tpu as pltpu

_IGNORE_INDEX = -100
_NEG_BIG = -1e30  # f32-safe "minus infinity" for masking padded class lanes


def _round_up(x, m):
    return ((x + m - 1) // m) * m


def _vmem_limit_bytes():
    """Per-generation VMEM limit with headroom (v7x: 64 MiB, v5e/v6e: 128 MiB)."""
    cap = 64 * 1024 * 1024  # conservative default (v7x-sized)
    try:
        cap = int(pltpu.get_tpu_info().vmem_capacity_bytes)
    except Exception:  # interpret mode / older jax -> keep conservative default
        pass
    return max(32 * 1024 * 1024, min(cap - 16 * 1024 * 1024, 100 * 1024 * 1024))


def _pick_token_tile(n_tok, emb, c_pad, x_bytes, logit_bytes, vmem_limit,
                     token_tile, align=16):
    """Largest row tile fitting the VMEM budget (double-buffered x / logits /
    labels, single-buffered W / bias), capped so short inputs still produce
    >= 2 grid steps (keeps both v7x TensorCores busy)."""
    budget = int(vmem_limit * 0.85)
    fixed = emb * c_pad * 2 + c_pad * 4                      # W (bf16) + bias (f32), 1 buffer each
    per_row = 2 * emb * x_bytes + 2 * c_pad * logit_bytes + 2 * 4
    tm = max(align, (budget - fixed) // max(per_row, 1))
    if token_tile is not None:
        tm = min(tm, token_tile)
    tm = min(tm, 4096)
    tm = min(tm, _round_up(n_tok, align))
    if tm >= n_tok and n_tok >= 2 * align:                   # megacore: prefer >= 2 tiles
        tm = _round_up((n_tok + 1) // 2, align)
    return max(align, (tm // align) * align)


# ---------------------------------------------------------------------------
# Kernel bodies
# ---------------------------------------------------------------------------
def _ce_tile_partials(logits, lab_ref, n_classes, n_tokens):
    """Per-tile (loss-sum, valid-count) packed into one (1, 8, 128) f32 tile:
    sublane 0 = loss sum, sublane 1 = valid-token count."""
    labels = lab_ref[...]                                            # (tm, 1) i32
    col = jax.lax.broadcasted_iota(jnp.int32, logits.shape, 1)

    # Padded class lanes must not contribute to max / log-sum-exp.
    masked = jnp.where(col < n_classes, logits, _NEG_BIG)
    m = jnp.max(masked, axis=-1, keepdims=True)
    lse = m + jnp.log(jnp.sum(jnp.exp(masked - m), axis=-1, keepdims=True))

    # Target-class logit via one-hot (no gather on TPU).
    onehot = (col == labels).astype(jnp.float32)
    picked = jnp.sum(logits * onehot, axis=-1, keepdims=True)

    # Mask ignore_index rows AND ragged-tail rows (rows >= n_tokens read
    # unspecified data; jnp.where keeps them out of the sums, NaN/inf safe).
    row = (pl.program_id(0) * labels.shape[0]
           + jax.lax.broadcasted_iota(jnp.int32, labels.shape, 0))
    valid = jnp.logical_and(labels != _IGNORE_INDEX, row < n_tokens)
    per_tok = jnp.where(valid, lse - picked, 0.0)

    sub = jax.lax.broadcasted_iota(jnp.int32, (1, 8, 128), 1)
    return jnp.where(sub == 0, jnp.sum(per_tok),
                     jnp.where(sub == 1, jnp.sum(valid.astype(jnp.float32)), 0.0))


def classifier_kernel(x_ref, w_ref, b_ref, logits_ref):
    # x cast to bf16 on-VPU here (no separate XLA cast pass over x in HBM).
    acc = jnp.dot(x_ref[...].astype(jnp.bfloat16), w_ref[...],
                  preferred_element_type=jnp.float32)
    logits_ref[...] = (acc + b_ref[...]).astype(logits_ref.dtype)


def classifier_ce_kernel(x_ref, w_ref, b_ref, lab_ref, logits_ref, part_ref,
                         *, n_classes, n_tokens):
    acc = jnp.dot(x_ref[...].astype(jnp.bfloat16), w_ref[...],
                  preferred_element_type=jnp.float32)
    logits = acc + b_ref[...]                                        # f32
    logits_ref[...] = logits.astype(logits_ref.dtype)                # bf16 stream by default
    part_ref[...] = _ce_tile_partials(logits, lab_ref, n_classes, n_tokens)


def classifier_ce_loss_only_kernel(x_ref, w_ref, b_ref, lab_ref, part_ref,
                                   *, n_classes, n_tokens):
    acc = jnp.dot(x_ref[...].astype(jnp.bfloat16), w_ref[...],
                  preferred_element_type=jnp.float32)
    logits = acc + b_ref[...]
    part_ref[...] = _ce_tile_partials(logits, lab_ref, n_classes, n_tokens)


# ---------------------------------------------------------------------------
# TokenClassifier forward (glue in plain JAX)
# ---------------------------------------------------------------------------
@functools.partial(jax.jit,
                   static_argnames=("token_tile", "need_logits", "logits_dtype"))
def token_classifier_forward(x, w, b, labels=None, *, token_tile=None,
                             need_logits=True, logits_dtype=jnp.bfloat16):
    """x: (B, S, E), w: (E, C), b: (C,), labels: (B, S) int or None.

    Dropout is eval-mode (identity). Returns {"loss", "token_class_logits"}.
    need_logits=False (with labels) skips the logits HBM write entirely.
    """
    bsz, seq, emb = x.shape
    n_cls = w.shape[1]
    n_tok = bsz * seq

    # Lane-dense class padding; 256-granular above 128 to fill v6e/v7x MXU.
    c_pad = _round_up(n_cls, 128) if n_cls <= 128 else _round_up(n_cls, 256)

    vmem_limit = _vmem_limit_bytes()
    emit_logits = need_logits or labels is None
    logit_bytes = jnp.dtype(logits_dtype).itemsize if emit_logits else 0
    tm = _pick_token_tile(n_tok, emb, c_pad, x.dtype.itemsize, logit_bytes,
                          vmem_limit, token_tile)
    grid_n = -(-n_tok // tm)          # ragged tail handled by masked partial blocks

    # Dropout (eval mode) == identity, so the hot path is matmul + bias (+ CE).
    x_tok = x.reshape(n_tok, emb)                       # no copy, no dtype cast here
    w_bf = jnp.pad(w, ((0, 0), (0, c_pad - n_cls))).astype(jnp.bfloat16)
    b2d = jnp.pad(b.astype(jnp.float32), (0, c_pad - n_cls)).reshape(1, c_pad)

    x_spec = pl.BlockSpec((tm, emb), lambda i: (i, 0))
    # W / bias block index never changes across the grid -> single buffer.
    w_spec = pl.BlockSpec((emb, c_pad), lambda i: (0, 0),
                          pipeline_mode=pl.Buffered(1))
    b_spec = pl.BlockSpec((1, c_pad), lambda i: (0, 0),
                          pipeline_mode=pl.Buffered(1))
    logits_spec = pl.BlockSpec((tm, c_pad), lambda i: (i, 0))
    part_spec = pl.BlockSpec((1, 8, 128), lambda i: (i, 0, 0))

    compiler_params = pltpu.CompilerParams(
        dimension_semantics=("parallel",),              # megacore-friendly on v7x
        vmem_limit_bytes=vmem_limit,
    )

    logits_out = None
    loss = None

    if labels is None:
        logits_out = pl.pallas_call(
            classifier_kernel,
            out_shape=jax.ShapeDtypeStruct((n_tok, c_pad), logits_dtype),
            grid_spec=pltpu.PrefetchScalarGridSpec(
                num_scalar_prefetch=0,
                grid=(grid_n,),
                in_specs=[x_spec, w_spec, b_spec],
                out_specs=logits_spec,
            ),
            compiler_params=compiler_params,
        )(x_tok, w_bf, b2d)
    else:
        lab2d = labels.reshape(n_tok).astype(jnp.int32).reshape(n_tok, 1)
        lab_spec = pl.BlockSpec((tm, 1), lambda i: (i, 0))

        if need_logits:
            logits_out, parts = pl.pallas_call(
                functools.partial(classifier_ce_kernel,
                                  n_classes=n_cls, n_tokens=n_tok),
                out_shape=(
                    jax.ShapeDtypeStruct((n_tok, c_pad), logits_dtype),
                    jax.ShapeDtypeStruct((grid_n, 8, 128), jnp.float32),
                ),
                grid_spec=pltpu.PrefetchScalarGridSpec(
                    num_scalar_prefetch=0,
                    grid=(grid_n,),
                    in_specs=[x_spec, w_spec, b_spec, lab_spec],
                    out_specs=(logits_spec, part_spec),
                ),
                compiler_params=compiler_params,
            )(x_tok, w_bf, b2d, lab2d)
        else:
            parts = pl.pallas_call(
                functools.partial(classifier_ce_loss_only_kernel,
                                  n_classes=n_cls, n_tokens=n_tok),
                out_shape=jax.ShapeDtypeStruct((grid_n, 8, 128), jnp.float32),
                grid_spec=pltpu.PrefetchScalarGridSpec(
                    num_scalar_prefetch=0,
                    grid=(grid_n,),
                    in_specs=[x_spec, w_spec, b_spec, lab_spec],
                    out_specs=part_spec,
                ),
                compiler_params=compiler_params,
            )(x_tok, w_bf, b2d, lab2d)

        loss_sum = jnp.sum(parts[:, 0, 0])
        valid_cnt = jnp.sum(parts[:, 1, 0])
        # Plain division matches torch.nn.CrossEntropyLoss (NaN when every
        # label is ignore_index), unlike the previous max(cnt, 1) guard.
        loss = loss_sum / valid_cnt

    if logits_out is not None:
        # Row dim is already exact (ragged-tail grid). The class slice only
        # exists when C % 128 != 0; for lane-aligned class counts this is a
        # free reshape. (Downstream consumers could also fuse the slice.)
        if c_pad != n_cls:
            logits_out = logits_out[:, :n_cls]
        logits_out = logits_out.reshape(bsz, seq, n_cls)

    return {"loss": loss, "token_class_logits": logits_out}


# ---------------------------------------------------------------------------
# Reference (pure JAX, f32, ignore_index=-100) for sanity checking
# ---------------------------------------------------------------------------
def reference_forward(x, w, b, labels):
    logits = jnp.einsum("bse,ec->bsc", x, w) + b
    lf = logits.reshape(-1, logits.shape[-1])
    lab = labels.reshape(-1)
    valid = lab != _IGNORE_INDEX
    safe = jnp.where(valid, lab, 0)
    lse = jax.nn.logsumexp(lf, axis=-1)
    picked = jnp.take_along_axis(lf, safe[:, None], axis=-1)[:, 0]
    per = jnp.where(valid, lse - picked, 0.0)
    loss = jnp.sum(per) / jnp.sum(valid.astype(jnp.float32))
    return loss, logits


if __name__ == "__main__":
    key = jax.random.PRNGKey(0)
    batch, seq, emb, n_cls = 2, 8, 32, 8  # small shapes consistent with Linear(emb, n_cls)

    k_x, k_w, k_b, k_lab = jax.random.split(key, 4)
    x = jax.random.normal(k_x, (batch, seq, emb), dtype=jnp.float32)
    # Deterministic parameter init; W stored transposed as (E, C).
    w = (jax.random.uniform(k_w, (emb, n_cls), dtype=jnp.float32) - 0.5) * (2.0 / jnp.sqrt(emb))
    b = (jax.random.uniform(k_b, (n_cls,), dtype=jnp.float32) - 0.5) * (2.0 / jnp.sqrt(emb))
    labels = jax.random.randint(k_lab, (batch, seq), 0, n_cls, dtype=jnp.int32)
    labels = labels.at[0, 0].set(_IGNORE_INDEX)   # exercise ignore_index path

    # 1) labeled path: fused logits (bf16 stream) + CE partials
    out = token_classifier_forward(x, w, b, labels)
    logits = jax.block_until_ready(out["token_class_logits"])
    loss = jax.block_until_ready(out["loss"])

    # 2) labeled loss-only path (skips the logits HBM write entirely)
    out_lo = token_classifier_forward(x, w, b, labels, need_logits=False)
    loss_only = jax.block_until_ready(out_lo["loss"])

    # 3) unlabeled path (logits only, loss=None)
    out_nl = token_classifier_forward(x, w, b)
    logits_nl = jax.block_until_ready(out_nl["token_class_logits"])

    ref_loss, ref_logits = reference_forward(x, w, b, labels)

    assert logits.shape == (batch, seq, n_cls)
    assert out_nl["loss"] is None
    assert out_lo["token_class_logits"] is None
    # bf16 MXU operands + bf16 logits stream vs f32 reference -> modest tolerance
    assert jnp.allclose(logits.astype(jnp.float32), ref_logits, atol=3e-2, rtol=3e-2)
    assert jnp.allclose(logits_nl.astype(jnp.float32), ref_logits, atol=3e-2, rtol=3e-2)
    assert jnp.allclose(loss, ref_loss, atol=3e-2, rtol=3e-2)
    assert jnp.allclose(loss_only, ref_loss, atol=3e-2, rtol=3e-2)

    print("KERNEL_OK")
</pallas_src>

<mosaic_0001>
module attributes {stable_mosaic.version = 11 : i64} {
  func.func @classifier_ce_kernel(%arg0: i32, %arg1: memref<16x32xf32, #tpu.memory_space<vmem>>, %arg2: memref<32x128xbf16, #tpu.memory_space<vmem>>, %arg3: memref<1x128xf32, #tpu.memory_space<vmem>>, %arg4: memref<16x1xi32, #tpu.memory_space<vmem>>, %arg5: memref<16x128xbf16, #tpu.memory_space<vmem>>, %arg6: memref<1x8x128xf32, #tpu.memory_space<vmem>>) attributes {dimension_semantics = [#tpu.dimension_semantics<parallel>], iteration_bounds = array<i64: 1>, scalar_prefetch = 0 : i64, scratch_operands = 0 : i64, tpu.core_type = #tpu.core_type<tc>, window_params = [{transform_indices = @transform_0, window_bounds = array<i64: 16, 32>}, {pipeline_mode = #tpu.pipeline_mode<synchronous>, transform_indices = @transform_1, window_bounds = array<i64: 32, 128>}, {pipeline_mode = #tpu.pipeline_mode<synchronous>, transform_indices = @transform_2, window_bounds = array<i64: 1, 128>}, {transform_indices = @transform_3, window_bounds = array<i64: 16, 1>}, {transform_indices = @transform_4, window_bounds = array<i64: 16, 128>}, {transform_indices = @transform_5, window_bounds = array<i64: 1, 8, 128>}]} {
    %c0 = arith.constant 0 : index
    %c0_0 = arith.constant 0 : index
    %0 = vector.load %arg1[%c0, %c0_0] : memref<16x32xf32, #tpu.memory_space<vmem>>, vector<16x32xf32>
    %1 = arith.truncf %0 : vector<16x32xf32> to vector<16x32xbf16>
    %c0_1 = arith.constant 0 : index
    %c0_2 = arith.constant 0 : index
    %2 = vector.load %arg2[%c0_1, %c0_2] : memref<32x128xbf16, #tpu.memory_space<vmem>>, vector<32x128xbf16>
    %cst = arith.constant dense<0.000000e+00> : vector<16x128xf32>
    %3 = tpu.matmul %1, %2, %cst {dimension_numbers = #tpu.dot_dimension_numbers<[1], [0], [0], [1], [0, 0, 1, 1], [], []>} : vector<16x32xbf16>, vector<32x128xbf16>, vector<16x128xf32> -> vector<16x128xf32>
    %c0_3 = arith.constant 0 : index
    %c0_4 = arith.constant 0 : index
    %4 = vector.load %arg3[%c0_3, %c0_4] : memref<1x128xf32, #tpu.memory_space<vmem>>, vector<1x128xf32>
    %5 = vector.broadcast %4 : vector<1x128xf32> to vector<16x128xf32>
    %6 = arith.addf %3, %5 : vector<16x128xf32>
    %7 = arith.truncf %6 : vector<16x128xf32> to vector<16x128xbf16>
    %c0_5 = arith.constant 0 : index
    %c0_6 = arith.constant 0 : index
    %8 = vector.load %arg5[%c0_5, %c0_6] : memref<16x128xbf16, #tpu.memory_space<vmem>>, vector<16x128xbf16>
    tpu.vector_store %arg5[%c0_5, %c0_6], %7 {strides = array<i32>} : memref<16x128xbf16, #tpu.memory_space<vmem>>, vector<16x128xbf16>,
    %c0_7 = arith.constant 0 : index
    %c0_8 = arith.constant 0 : index
    %9 = vector.load %arg4[%c0_7, %c0_8] : memref<16x1xi32, #tpu.memory_space<vmem>>, vector<16x1xi32>
    %10 = tpu.iota {dimensions = array<i32: 1>} : vector<16x128xi32>
    %c8_i32 = arith.constant 8 : i32
    %11 = vector.broadcast %c8_i32 : i32 to vector<16x128xi32>
    %12 = arith.cmpi slt, %10, %11 : vector<16x128xi32>
    %cst_9 = arith.constant -1.000000e+30 : f32
    %13 = vector.broadcast %cst_9 : f32 to vector<16x128xf32>
    %14 = arith.select %12, %6, %13 : vector<16x128xi1>, vector<16x128xf32>
    %cst_10 = arith.constant dense<0xFF800000> : vector<16xf32>
    %15 = vector.multi_reduction <maximumf>, %14, %cst_10 [1] : vector<16x128xf32> to vector<16xf32>
    %16 = vector.shape_cast %15 : vector<16xf32> to vector<16x1xf32>
    %17 = vector.broadcast %16 : vector<16x1xf32> to vector<16x128xf32>
    %18 = arith.subf %14, %17 : vector<16x128xf32>
    %19 = math.exp %18 : vector<16x128xf32>
    %cst_11 = arith.constant dense<0.000000e+00> : vector<16xf32>
    %20 = vector.multi_reduction <add>, %19, %cst_11 [1] : vector<16x128xf32> to vector<16xf32>
    %21 = vector.shape_cast %20 : vector<16xf32> to vector<16x1xf32>
    %22 = math.log %21 : vector<16x1xf32>
    %23 = arith.addf %16, %22 : vector<16x1xf32>
    %24 = vector.broadcast %9 : vector<16x1xi32> to vector<16x128xi32>
    %25 = arith.cmpi eq, %10, %24 : vector<16x128xi32>
    %26 = arith.extui %25 : vector<16x128xi1> to vector<16x128xi32>
    %27 = arith.sitofp %26 : vector<16x128xi32> to vector<16x128xf32>
    %28 = arith.mulf %6, %27 : vector<16x128xf32>
    %cst_12 = arith.constant dense<0.000000e+00> : vector<16xf32>
    %29 = vector.multi_reduction <add>, %28, %cst_12 [1] : vector<16x128xf32> to vector<16xf32>
    %30 = vector.shape_cast %29 : vector<16xf32> to vector<16x1xf32>
    %c16_i32 = arith.constant 16 : i32
    %31 = arith.muli %arg0, %c16_i32 : i32
    %32 = tpu.iota {dimensions = array<i32: 0>} : vector<16x1xi32>
    %33 = vector.broadcast %31 : i32 to vector<16x1xi32>
    %34 = arith.addi %33, %32 : vector<16x1xi32>
    %c-100_i32 = arith.constant -100 : i32
    %35 = vector.broadcast %c-100_i32 : i32 to vector<16x1xi32>
    %36 = arith.cmpi ne, %9, %35 : vector<16x1xi32>
    %c16_i32_13 = arith.constant 16 : i32
    %37 = vector.broadcast %c16_i32_13 : i32 to vector<16x1xi32>
    %38 = arith.cmpi slt, %34, %37 : vector<16x1xi32>
    %39 = arith.andi %36, %38 : vector<16x1xi1>
    %40 = arith.subf %23, %30 : vector<16x1xf32>
    %cst_14 = arith.constant 0.000000e+00 : f32
    %41 = vector.broadcast %cst_14 : f32 to vector<16x1xf32>
    %42 = arith.select %39, %40, %41 : vector<16x1xi1>, vector<16x1xf32>
    %43 = tpu.iota {dimensions = array<i32: 1>} : vector<1x8x128xi32>
    %c0_i32 = arith.constant 0 : i32
    %44 = vector.broadcast %c0_i32 : i32 to vector<1x8x128xi32>
    %45 = arith.cmpi eq, %43, %44 : vector<1x8x128xi32>
    %46 = vector.shape_cast %42 : vector<16x1xf32> to vector<1x16x1xf32>
    %cst_15 = arith.constant dense<0.000000e+00> : vector<1xf32>
    %47 = vector.multi_reduction <add>, %46, %cst_15 [1, 2] : vector<1x16x1xf32> to vector<1xf32>
    %48 = vector.shape_cast %47 : vector<1xf32> to vector<1x1x1xf32>
    %49 = vector.extract %48[0, 0, 0] : f32 from vector<1x1x1xf32>
    %c1_i32 = arith.constant 1 : i32
    %50 = vector.broadcast %c1_i32 : i32 to vector<1x8x128xi32>
    %51 = arith.cmpi eq, %43, %50 : vector<1x8x128xi32>
    %52 = arith.extui %39 : vector<16x1xi1> to vector<16x1xi32>
    %53 = arith.sitofp %52 : vector<16x1xi32> to vector<16x1xf32>
    %54 = vector.shape_cast %53 : vector<16x1xf32> to vector<1x16x1xf32>
    %cst_16 = arith.constant dense<0.000000e+00> : vector<1xf32>
    %55 = vector.multi_reduction <add>, %54, %cst_16 [1, 2] : vector<1x16x1xf32> to vector<1xf32>
    %56 = vector.shape_cast %55 : vector<1xf32> to vector<1x1x1xf32>
    %57 = vector.extract %56[0, 0, 0] : f32 from vector<1x1x1xf32>
    %cst_17 = arith.constant 0.000000e+00 : f32
    %58 = vector.broadcast %57 : f32 to vector<1x8x128xf32>
    %59 = vector.broadcast %cst_17 : f32 to vector<1x8x128xf32>
    %60 = arith.select %51, %58, %59 : vector<1x8x128xi1>, vector<1x8x128xf32>
    %61 = vector.broadcast %49 : f32 to vector<1x8x128xf32>
    %62 = arith.select %45, %61, %60 : vector<1x8x128xi1>, vector<1x8x128xf32>
    %c0_18 = arith.constant 0 : index
    %c0_19 = arith.constant 0 : index
    %c0_20 = arith.constant 0 : index
    %63 = vector.load %arg6[%c0_18, %c0_19, %c0_20] : memref<1x8x128xf32, #tpu.memory_space<vmem>>, vector<1x8x128xf32>
    tpu.vector_store %arg6[%c0_18, %c0_19, %c0_20], %62 {strides = array<i32>} : memref<1x8x128xf32, #tpu.memory_space<vmem>>, vector<1x8x128xf32>,
    return
  }
  func.func @transform_0(%arg0: i32) -> (i32, i32) {
    %c0_i32 = arith.constant 0 : i32
    %c0_i32_0 = arith.constant 0 : i32
    return %arg0, %c0_i32 : i32, i32
  }
  func.func @transform_1(%arg0: i32) -> (i32, i32) {
    %c0_i32 = arith.constant 0 : i32
    %c0_i32_0 = arith.constant 0 : i32
    %c0_i32_1 = arith.constant 0 : i32
    return %c0_i32, %c0_i32_0 : i32, i32
  }
  func.func @transform_2(%arg0: i32) -> (i32, i32) {
    %c0_i32 = arith.constant 0 : i32
    %c0_i32_0 = arith.constant 0 : i32
    %c0_i32_1 = arith.constant 0 : i32
    return %c0_i32, %c0_i32_0 : i32, i32
  }
  func.func @transform_3(%arg0: i32) -> (i32, i32) {
    %c0_i32 = arith.constant 0 : i32
    %c0_i32_0 = arith.constant 0 : i32
    return %arg0, %c0_i32 : i32, i32
  }
  func.func @transform_4(%arg0: i32) -> (i32, i32) {
    %c0_i32 = arith.constant 0 : i32
    %c0_i32_0 = arith.constant 0 : i32
    return %arg0, %c0_i32 : i32, i32
  }
  func.func @transform_5(%arg0: i32) -> (i32, i32, i32) {
    %c0_i32 = arith.constant 0 : i32
    %c0_i32_0 = arith.constant 0 : i32
    %c0_i32_1 = arith.constant 0 : i32
    return %arg0, %c0_i32, %c0_i32_0 : i32, i32, i32
  }
}

</mosaic_0001>

<llo_original>
// kernel: token_classifier_forward.1
$region0: #{token_classifier_forward.1}
  #allocation0 [shape = 'u32[]', space=smem, size = 0x4, offset = 0x4, fixed_abs, tag = 'smem constant byte address 0x4 - core index']
  #allocation1 [shape = 'u32[144,128]{1,0:T(1,128)}', space=vmem, size = 0x12000, scoped, tag = 'internal scratch']
  %s0 = inlined_call_operand.vmem [shape: f32[16,32], index: 0, kind: input, shape index: {}]
  %s1 = inlined_call_operand.vmem [shape: bf16[32,128], index: 1, kind: input, shape index: {}]
  %s2 = inlined_call_operand.vmem [shape: f32[1,128], index: 2, kind: input, shape index: {}]
  %s3 = inlined_call_operand.vmem [shape: s32[16,1], index: 3, kind: input, shape index: {}]
  %s4 = inlined_call_operand.vmem [shape: bf16[16,128], index: 4, kind: output, shape index: {0}]
  %s5 = inlined_call_operand.vmem [shape: f32[1,8,128], index: 5, kind: output, shape index: {1}]
  %6 = xla_tuple %s4, %s5
  %s7 = sld [smem:[#allocation0]]
  $region34: #{token_classifier_forward.1} parent=0
    _
  %s9 = ssub.s32 1, %s7
  %s10 = scalar_select 0, %s9, %s7
  // Predicated region
  $region2: #{token_classifier_forward.1} parent=0 // pred_check
    _
  $region3: #{token_classifier_forward.1} parent=0 // pred_check_branch
    %12 = sbr.rel (0) target = $region5
  $region4: #{token_classifier_forward.1} parent=0 // pred_region
    _
  $region5: #{token_classifier_forward.1} parent=0 // pred_fallthru
    _
  // Predicated region
  $region6: #{token_classifier_forward.1} parent=0 // pred_check
    _
  $region7: #{token_classifier_forward.1} parent=0 // pred_check_branch
    %14 = sbr.rel (0) target = $region9
  $region8: #{token_classifier_forward.1} parent=0 // pred_region
    _
  $region9: #{token_classifier_forward.1} parent=0 // pred_fallthru
    _
  // Predicated region
  $region10: #{token_classifier_forward.1} parent=0 // pred_check
    _
  $region11: #{token_classifier_forward.1} parent=0 // pred_check_branch
    %16 = sbr.rel (0) target = $region13
  $region12: #{token_classifier_forward.1} parent=0 // pred_region
    _
  $region13: #{token_classifier_forward.1} parent=0 // pred_fallthru
    _
  // Predicated region
  $region14: #{token_classifier_forward.1} parent=0 // pred_check
    _
  $region15: #{token_classifier_forward.1} parent=0 // pred_check_branch
    %18 = sbr.rel (0) target = $region17
  $region16: #{token_classifier_forward.1} parent=0 // pred_region
    _
  $region17: #{token_classifier_forward.1} parent=0 // pred_fallthru
    _
  %v20 = vld [vmem:[%s0] sm:$0xff]
  %v21 = vld [vmem:[%s0 + $0x8] sm:$0xff]
  %v22 = vpack.c.bf16 %v21, %v20
  %v23 = vld [vmem:[%s1] sm:$0xf]
  %v24 = vld [vmem:[%s1 + $0x4] sm:$0xf]
  %v25 = vld [vmem:[%s1 + $0x8] sm:$0xf]
  %v26 = vld [vmem:[%s1 + $0xc] sm:$0xf]
  %v27 = vld [vmem:[%s2] sm:$0x1]
  %v29 = vlaneseq
  %v30 = vshrl.u32 %v29, 7
  %v31 = vsub.s32 0, %v30
  %v32 = vrot.slane %v27, %v31
  %v38 = vunpack.c.l.b16 %v23
  %v39 = vunpack.c.l.b16 %v24
  %v40 = vunpack.c.l.b16 %v25
  %v41 = vunpack.c.l.b16 %v26
  %v42 = vpack.c.b16 %v39, %v38
  %v43 = vpack.c.b16 %v41, %v40
  %vm46 = vcmask 261120
  %v48 = vsel %vm46, %v22, 0
  %50 = vmatprep.subr.bf16.mxu0 0
  %51 = vmatpush1.bf16.msra.mxu0 %v42
  %52 = vmatprep.subr.bf16.mxu0 0
  %53 = vmatpush1.bf16.msra.mxu0 %v43
  %54 = vmatprep.subr.bf16.mxu0 0
  %55 = vmatpush1.bf16.msra.mxu0 0
  %56 = vmatprep.subr.bf16.mxu0 0
  %57 = vmatpush1.bf16.msra.mxu0 0
  %58 = vmatprep.subr.bf16.mxu0 0
  %59 = vmatpush1.bf16.msra.mxu0 0
  %60 = vmatprep.subr.bf16.mxu0 0
  %61 = vmatpush1.bf16.msra.mxu0 0
  %62 = vmatprep.subr.bf16.mxu0 0
  %63 = vmatpush1.bf16.msra.mxu0 0
  %64 = vmatprep.subr.bf16.mxu0 0
  %65 = vmatpush1.bf16.msra.mxu0 0
  %66 = vmatprep.subr.bf16.mxu0 0
  %67 = vmatpush1.bf16.msra.mxu0 0
  %68 = vmatprep.subr.bf16.mxu0 0
  %69 = vmatpush1.bf16.msra.mxu0 0
  %70 = vmatprep.subr.bf16.mxu0 0
  %71 = vmatpush1.bf16.msra.mxu0 0
  %72 = vmatprep.subr.bf16.mxu0 0
  %73 = vmatpush1.bf16.msra.mxu0 0
  %74 = vmatprep.subr.bf16.mxu0 0
  %75 = vmatpush1.bf16.msra.mxu0 0
  %76 = vmatprep.subr.bf16.mxu0 0
  %77 = vmatpush1.bf16.msra.mxu0 0
  %78 = vmatprep.subr.bf16.mxu0 0
  %79 = vmatpush1.bf16.msra.mxu0 0
  %80 = vmatprep.subr.bf16.mxu0 0
  %81 = vmatpush1.bf16.msra.mxu0 0
  %82 = vmatprep.mubr.bf16.mxu0 0
  %83 = vmatmul.mubr.bf16.gmra.mrb[0].mxu0 %v48
  %v84 = vpop.f32.mrb[0].mxu0
  %v85 = vadd.f32 %v32, %v84
  %v86 = vpop.f32.mrb[0].mxu0
  %v87 = vpop.f32.mrb[0].mxu0
  %v88 = vadd.f32 %v32, %v87
  %v89 = vpop.f32.mrb[0].mxu0
  %90 = vdwg.mxu0
  %v91 = vpack.c.bf16 %v88, %v85
  %v93 = vunpack.c.l.b16 %v91
  %v94 = vunpack.c.h.b16 %v91
  %v95 = vpack.c.b16 %v93, %v93
  %v96 = vpack.c.b16 %v94, %v94
  %99 = vst [vmem:[%s4] sm:$0xf] %v95
  %100 = vst [vmem:[%s4 + $0x4] sm:$0xf] %v96
  %v101 = vld [vmem:[%s3] sm:$0xff]
  %v102 = vld [vmem:[%s3 + $0x8] sm:$0xff]
  %v103 = vlaneseq
  %v104 = vand.u32 %v103, 127
  %vm105 = vcmp.lt.s32.totalorder %v104, 8
  %v106 = vsel %vm105, %v85, -1e+30
  %v107 = vsel %vm105, %v88, -1e+30
  %108 = vmax.xlane.f32.xlu0 %v106
  %v109 = vpop.xlane.xlu0 %108
  %110 = vmax.xlane.f32.xlu0 %v107
  %v111 = vpop.xlane.xlu0 %110
  %v112 = vsub.f32 %v106, %v109
  %v113 = vsub.f32 %v107, %v111
  %v114 = vmul.f32 %v112, 1.442695
  %v115 = vpow.pop %v114
  %v116 = vmul.f32 %v113, 1.442695
  %v117 = vpow.pop %v116
  %118 = vadd.xlane.f32.xlu0 %v115
  %v119 = vpop.xlane.xlu0 %118
  %120 = vadd.xlane.f32.xlu0 %v117
  %v121 = vpop.xlane.xlu0 %120
  %v122 = vlog2.pop %v119
  %v123 = vmul.f32 %v122, 0.6931472
  %v124 = vlog2.pop %v121
  %v125 = vmul.f32 %v124, 0.6931472
  %v126 = vadd.f32 %v109, %v123
  %v127 = vadd.f32 %v111, %v125
  %128 = vset.pattern.permute.xlu0 0
  %129 = vperm.xlu0 %128, %v101
  %v130 = vpop.permute.xlu0 %129
  %131 = vset.pattern.permute.xlu0 0
  %132 = vperm.xlu0 %131, %v102
  %v133 = vpop.permute.xlu0 %132
  %vm134 = vcmp.eq.s32.totalorder %v104, %v130
  %vm135 = vcmp.eq.s32.totalorder %v104, %v133
  %v136 = vsel %vm134, 1, 0
  %v137 = vsel %vm135, 1, 0
  %v138 = vcvt.s32.f32 %v136
  %v139 = vcvt.s32.f32 %v137
  %v140 = vmul.f32 %v85, %v138
  %v141 = vmul.f32 %v88, %v139
  %142 = vadd.xlane.f32.xlu0 %v140
  %v143 = vpop.xlane.xlu0 %142
  %144 = vadd.xlane.f32.xlu0 %v141
  %v145 = vpop.xlane.xlu0 %144
  %s146 = smul.u32 0, 16
  %v147 = vlaneseq
  %v148 = vshrl.u32 %v147, 7
  %v149 = vadd.s32 %v148, 8
  %v150 = vstv %s146
  %v151 = vadd.s32 %v150, %v148
  %v152 = vadd.s32 %v150, %v149
  %vm153 = vcmp.ne.s32.totalorder %v101, 4294967196
  %vm154 = vcmp.ne.s32.totalorder %v102, 4294967196
  %vm155 = vcmp.lt.s32.totalorder %v151, 16
  %vm156 = vcmp.lt.s32.totalorder %v152, 16
  %vm157 = vmand %vm153, %vm155
  %vm158 = vmand %vm154, %vm156
  %v159 = vsub.f32 %v126, %v143
  %v160 = vsub.f32 %v127, %v145
  %v161 = vsel %vm157, %v159, 0.0
  %v162 = vsel %vm158, %v160, 0.0
  %vm163 = vcmp.eq.s32.totalorder %v148, 0
  %vm164 = vcmask 7168
  %v165 = vsel %vm164, %v161, 0.0
  %v166 = vsel %vm164, %v162, 0.0
  %v167 = vadd.f32 %v165, %v166
  %168 = vadd.xlane.f32.xlu0 %v167
  %v169 = vpop.xlane.xlu0 %168
  %v170 = vrot.slane %v169, 4
  %v171 = vadd.f32 %v169, %v170
  %v172 = vrot.slane %v171, 2
  %v173 = vadd.f32 %v171, %v172
  %v174 = vrot.slane %v173, 1
  %v175 = vadd.f32 %v173, %v174
  %s176 = vtos %v175
  %vm177 = vcmp.eq.s32.totalorder %v148, 1
  %v178 = vsel %vm157, 1, 0
  %v179 = vsel %vm158, 1, 0
  %v180 = vcvt.s32.f32 %v178
  %v181 = vcvt.s32.f32 %v179
  %v182 = vsel %vm164, %v180, 0.0
  %v183 = vsel %vm164, %v181, 0.0
  %v184 = vadd.f32 %v182, %v183
  %185 = vadd.xlane.f32.xlu0 %v184
  %v186 = vpop.xlane.xlu0 %185
  %v187 = vrot.slane %v186, 4
  %v188 = vadd.f32 %v186, %v187
  %v189 = vrot.slane %v188, 2
  %v190 = vadd.f32 %v188, %v189
  %v191 = vrot.slane %v190, 1
  %v192 = vadd.f32 %v190, %v191
  %s193 = vtos %v192
  %v194 = vstv %s193
  %v195 = vsel %vm177, %v194, 0.0
  %v196 = vstv %s176
  %v197 = vsel %vm163, %v196, %v195
  %198 = vst [vmem:[%s5] sm:$0xff] %v197
  // Predicated region
  $region18: #{token_classifier_forward.1} parent=0 // pred_check
    _
  $region19: #{token_classifier_forward.1} parent=0 // pred_check_branch
    %200 = sbr.rel (0) target = $region21
  $region20: #{token_classifier_forward.1} parent=0 // pred_region
    _
  $region21: #{token_classifier_forward.1} parent=0 // pred_fallthru
    _
  // Predicated region
  $region22: #{token_classifier_forward.1} parent=0 // pred_check
    _
  $region23: #{token_classifier_forward.1} parent=0 // pred_check_branch
    %202 = sbr.rel (0) target = $region25
  $region24: #{token_classifier_forward.1} parent=0 // pred_region
    _
  $region25: #{token_classifier_forward.1} parent=0 // pred_fallthru
    _
  // Predicated region
  $region26: #{token_classifier_forward.1} parent=0 // pred_check
    _
  $region27: #{token_classifier_forward.1} parent=0 // pred_check_branch
    %204 = sbr.rel (0) target = $region29
  $region28: #{token_classifier_forward.1} parent=0 // pred_region
    _
  $region29: #{token_classifier_forward.1} parent=0 // pred_fallthru
    _
  // Predicated region
  $region30: #{token_classifier_forward.1} parent=0 // pred_check
    _
  $region31: #{token_classifier_forward.1} parent=0 // pred_check_branch
    %206 = sbr.rel (0) target = $region33
  $region32: #{token_classifier_forward.1} parent=0 // pred_region
    _
  $region33: #{token_classifier_forward.1} parent=0 // pred_fallthru
    _

</llo_original>
